<compile_context>
chip_gen: v7x
topology: tpu7x:2x2x1
jax: 0.10.0
libtpu: 0.0.40
codegen_flags: <defaults>
</compile_context>

<pallas_src>
import functools
import math

import jax
import jax.numpy as jnp
import numpy as np
from jax.experimental import pallas as pl
from jax.experimental.pallas import tpu as pltpu

BN_EPS = 1e-5
LANE = 128       # pad every channel axis to full 128-lane vregs
SUBLANE = 8      # per-sequence time blocks are rounded up to sublane multiples


def _gelu_exact(x):
    # torch.nn.GELU default: 0.5 * x * (1 + erf(x / sqrt(2)))
    return 0.5 * x * (1.0 + jax.lax.erf(x * (1.0 / math.sqrt(2.0))))


def _round_up(n, m):
    return -(-n // m) * m


def _choose_batch_block(batch, lb, m_target=256):
    """Sequences per grid step: feed the MXU (M = bb*lb rows, target >=256)
    while keeping >= 2 parallel grid steps when the batch allows (v7x has two
    TensorCores; v5e/v6e lose nothing)."""
    bb = max(1, min(batch, -(-m_target // lb)))
    if batch >= 2 and bb > batch // 2:
        bb = max(1, batch // 2)
    while batch % bb:          # bb must divide B (no in-kernel masking)
        bb -= 1
    return bb


def _fold_and_pad(params, dil):
    """Fold eval-mode BN + conv bias into the weights, lane-pad channels,
    im2col-reshape each layer to (k*Cin_p, Cout_p) and pack all layers into
    ONE bf16 weight slab + ONE f32 bias slab.

    Returns (w_all bf16 (sum_K, Cmax), b_all f32 (5, Cmax), layer meta).
    Zero padding guarantees padded lanes stay exactly zero through the stack
    (pad bias = 0, GELU(0) = 0, padded weight rows/cols = 0)."""
    blocks, biases, meta = [], [], []
    row = 0
    for li in range(5):
        w = params[f"w{li}"].astype(jnp.float32)            # (k, Cin, Cout)
        b = params[f"b{li}"].astype(jnp.float32)            # (1, Cout)
        bn = params.get(f"bn{li}")
        if bn is not None:
            scale = bn["gamma"] * jax.lax.rsqrt(bn["var"] + BN_EPS)
            w = w * scale                                   # broadcast on Cout
            b = bn["beta"] + (b - bn["mean"]) * scale
        k, cin, cout = w.shape
        cin_p, cout_p = _round_up(cin, LANE), _round_up(cout, LANE)
        w = jnp.pad(w, ((0, 0), (0, cin_p - cin), (0, cout_p - cout)))
        blocks.append(w.reshape(k * cin_p, cout_p))         # tap-major rows
        biases.append(jnp.pad(b, ((0, 0), (0, cout_p - cout))))
        meta.append((k, dil[li], cin_p, cout_p, li < 4, row))
        row += k * cin_p
    cmax = max(blk.shape[1] for blk in blocks)
    w_all = jnp.concatenate(
        [jnp.pad(blk, ((0, 0), (0, cmax - blk.shape[1]))) for blk in blocks],
        axis=0).astype(jnp.bfloat16)                        # bf16 MXU operands
    b_all = jnp.concatenate(
        [jnp.pad(bia, ((0, 0), (0, cmax - bia.shape[1]))) for bia in biases],
        axis=0)                                             # f32 bias
    return w_all, b_all, tuple(meta)


def _make_fused_kernel(T, layers):
    """Fused per-block kernel: (conv+BN+GELU) x4 -> 1x1 conv, all in VMEM.

    layers: tuple of (k, dilation, cin_p, cout_p, apply_gelu, weight_row).
    The bb sequences in the block are stacked along the sublane/M axis; each
    occupies a fixed stride of `lb` rows for the whole layer stack, so the
    valid rows of sequence b always start at b*lb and junk rows only ever feed
    junk rows (never read back as valid output)."""

    def kernel(x_ref, w_ref, b_ref, o_ref):
        bb, lb, c_in = x_ref.shape
        m = bb * lb
        # lb % 8 == 0 (wrapper) -> relayout-free merge into one MXU M axis.
        h = x_ref[...].reshape(m, c_in).astype(jnp.float32)

        for li, (k, dil, cin_p, cout_p, act, row) in enumerate(layers):
            if k == 1:
                cols = h.astype(jnp.bfloat16)
            else:
                # Fixed-length causal taps: extend with "don't care" rows so M
                # stays constant; extension-fed rows land only in per-sequence
                # junk tails.  Single K = k*Cin_p matmul (one pass on the
                # 256-deep v6e/v7x MXU).  v5e alternative: accumulate k
                # separate K=128 dots and skip materializing `cols`.
                ext = jnp.zeros(((k - 1) * dil, h.shape[1]), jnp.float32)
                h_ext = jnp.concatenate([h, ext], axis=0)
                taps = [h] + [h_ext[t * dil:t * dil + m, :] for t in range(1, k)]
                cols = jnp.concatenate(taps, axis=1).astype(jnp.bfloat16)
            w = w_ref[row:row + k * cin_p, :cout_p]          # bf16, BN+bias folded
            acc = jnp.dot(cols, w, preferred_element_type=jnp.float32)
            acc = acc + b_ref[li:li + 1, :cout_p]            # f32 bias
            h = _gelu_exact(acc) if act else acc

        # Lane-dense stores, each at a sublane-aligned offset (lb % 8 == 0).
        for b in range(bb):
            o_ref[b] = h[b * lb:b * lb + T, :].astype(o_ref.dtype)

    return kernel


def cnnb_forward(x, params, *, ks, ds):
    """x: (B, T, in_dim) -> (B, T, in_dim).  Matches CNNB.forward; the
    transpose(1,2) pairs of the PyTorch module are absorbed into the
    (B, time, channels) layout used here."""
    B, T, in_dim = x.shape
    out_dim = in_dim
    dil = (1, ds[0], ds[0] * ds[1], ds[0] * ds[1] * ds[2], 1)
    ker = (ks[0], ks[1], ks[2], ks[3], 1)
    p0 = sum(dil[i] * (ker[i] - 1) for i in range(5))

    # TODO(synk): Dropout is identity and BatchNorm uses running stats
    # (inference mode); training-time dropout masks / stat updates not emitted.
    w_all, b_all, layers = _fold_and_pad(params, dil)

    # Wrapper-side layout plumbing (cheap XLA): replication pad, round the
    # per-sequence block length up to a sublane multiple (trailing edge rows
    # are never read as valid output), lane-pad channels to 128.
    lb = _round_up(p0 + T, SUBLANE)
    c_in = _round_up(in_dim, LANE)
    c_out = _round_up(out_dim, LANE)
    xp = jnp.pad(x.astype(jnp.float32),
                 ((0, 0), (p0, lb - (p0 + T)), (0, 0)), mode="edge")
    xp = jnp.pad(xp, ((0, 0), (0, 0), (0, c_in - in_dim)))

    bb = _choose_batch_block(B, lb)
    grid = (B // bb,)
    kernel = _make_fused_kernel(T, layers)

    # VMEM budget / cost hints (v7x has only 64 MiB VMEM per TensorCore).
    m = bb * lb
    cmax = int(w_all.shape[1])
    vmem_est = (2 * (bb * lb * c_in + bb * T * c_out) * 4     # dbl-buffered I/O
                + 2 * (w_all.size * 2 + b_all.size * 4)       # packed weights
                + 8 * m * max(cmax, 2 * LANE) * 4)            # h/cols/acc slack
    vmem_limit = int(min(64 << 20, max(2 * vmem_est, 32 << 20)))
    flops = 2 * B * lb * sum(k * ci * co for (k, _, ci, co, _, _) in layers)
    transcend = B * lb * sum(co for (_, _, _, co, act, _) in layers if act)
    bytes_acc = int(xp.size * 4 + w_all.size * 2 + b_all.size * 4
                    + B * T * c_out * 4)

    out = pl.pallas_call(
        kernel,
        out_shape=jax.ShapeDtypeStruct((B, T, c_out), x.dtype),
        grid=grid,
        in_specs=[
            pl.BlockSpec((bb, lb, c_in), lambda bi: (bi, 0, 0)),
            pl.BlockSpec(w_all.shape, lambda bi: (0, 0)),     # grid-invariant
            pl.BlockSpec(b_all.shape, lambda bi: (0, 0)),     # grid-invariant
        ],
        out_specs=pl.BlockSpec((bb, T, c_out), lambda bi: (bi, 0, 0)),
        compiler_params=pltpu.CompilerParams(
            dimension_semantics=("parallel",),
            vmem_limit_bytes=vmem_limit),
        cost_estimate=pl.CostEstimate(
            flops=int(flops), transcendentals=int(transcend),
            bytes_accessed=bytes_acc),
    )(xp, w_all, b_all)

    # TODO(synk): for very long sequences on v7x (64 MiB VMEM), add a time-tile
    # grid axis with a p0-row halo instead of keeping the whole padded
    # sequence resident per grid step.
    return out[..., :out_dim]


def cnnb_reference(x, params, *, ks, ds):
    """Pure-JAX reference with the original (unfolded) BN/bias math in f32."""
    dil = (1, ds[0], ds[0] * ds[1], ds[0] * ds[1] * ds[2], 1)
    ker = (ks[0], ks[1], ks[2], ks[3], 1)
    p0 = sum(dil[i] * (ker[i] - 1) for i in range(5))
    h = jnp.concatenate([jnp.repeat(x[:, :1, :], p0, axis=1), x], axis=1)
    for li in range(5):
        w, b = params[f"w{li}"], params[f"b{li}"]
        k = w.shape[0]
        d = dil[li]
        L_out = h.shape[1] - d * (k - 1)
        acc = sum(jnp.einsum("blc,cd->bld", h[:, t * d:t * d + L_out, :], w[t])
                  for t in range(k)) + b
        bn = params.get(f"bn{li}")
        if bn is not None:
            scale = bn["gamma"] * jax.lax.rsqrt(bn["var"] + BN_EPS)
            acc = (acc - bn["mean"]) * scale + bn["beta"]
            acc = _gelu_exact(acc)
        h = acc
    return h


def init_params(key, in_dim, c0, ks):
    """Deterministic, PyTorch-like init (uniform +-1/sqrt(fan_in) for convs)."""
    c1, c2, c3 = 2 * c0, 4 * c0, 8 * c0
    layer_dims = [
        (in_dim, c0, ks[0]),
        (c0, c1, ks[1]),
        (c1, c2, ks[2]),
        (c2, c3, ks[3]),
        (c3, in_dim, 1),
    ]
    params = {}
    keys = jax.random.split(key, 6 * len(layer_dims))
    ki = 0
    for li, (cin, cout, k) in enumerate(layer_dims):
        bound = 1.0 / math.sqrt(cin * k)
        params[f"w{li}"] = jax.random.uniform(
            keys[ki], (k, cin, cout), jnp.float32, -bound, bound); ki += 1
        params[f"b{li}"] = jax.random.uniform(
            keys[ki], (1, cout), jnp.float32, -bound, bound); ki += 1
        if li < 4:  # first four convs are followed by BatchNorm1d (+ GELU)
            params[f"bn{li}"] = {
                "gamma": 1.0 + 0.1 * jax.random.normal(
                    keys[ki], (1, cout), jnp.float32),
                "beta": 0.1 * jax.random.normal(
                    keys[ki + 1], (1, cout), jnp.float32),
                "mean": 0.1 * jax.random.normal(
                    keys[ki + 2], (1, cout), jnp.float32),
                "var": jax.random.uniform(
                    keys[ki + 3], (1, cout), jnp.float32, 0.5, 1.5),
            }
        ki += 4
    return params


if __name__ == "__main__":
    # Small synthetic config consistent with CNNB.__init__.
    B, T, in_dim = 2, 16, 8
    c0 = 8
    ks = (2, 2, 2, 2)
    ds = (2, 2, 2)

    key = jax.random.PRNGKey(0)
    kx, kp = jax.random.split(key)
    x = jax.random.normal(kx, (B, T, in_dim), jnp.float32)   # (batch, seq, dim)
    params = init_params(kp, in_dim, c0, ks)

    fwd = jax.jit(functools.partial(cnnb_forward, ks=ks, ds=ds))
    y = fwd(x, params)
    jax.block_until_ready(y)

    assert y.shape == (B, T, in_dim), y.shape
    assert jnp.all(jnp.isfinite(y))

    # bf16 MXU operands vs f32 reference -> loosened tolerance.
    y_ref = cnnb_reference(x, params, ks=ks, ds=ds)
    np.testing.assert_allclose(np.asarray(y), np.asarray(y_ref),
                               rtol=3e-2, atol=3e-2)
    print("KERNEL_OK")
</pallas_src>

<mosaic_0001>
module attributes {stable_mosaic.version = 11 : i64} {
  func.func @kernel(%arg0: i32, %arg1: memref<1x32x128xf32, #tpu.memory_space<vmem>>, %arg2: memref<1152x128xbf16, #tpu.memory_space<vmem>>, %arg3: memref<5x128xf32, #tpu.memory_space<vmem>>, %arg4: memref<1x16x128xf32, #tpu.memory_space<vmem>>) attributes {dimension_semantics = [#tpu.dimension_semantics<parallel>], iteration_bounds = array<i64: 2>, scalar_prefetch = 0 : i64, scratch_operands = 0 : i64, tpu.core_type = #tpu.core_type<tc>, window_params = [{transform_indices = @transform_0, window_bounds = array<i64: 1, 32, 128>}, {pipeline_mode = #tpu.pipeline_mode<synchronous>, transform_indices = @transform_1, window_bounds = array<i64: 1152, 128>}, {pipeline_mode = #tpu.pipeline_mode<synchronous>, transform_indices = @transform_2, window_bounds = array<i64: 5, 128>}, {transform_indices = @transform_3, window_bounds = array<i64: 1, 16, 128>}]} {
    %c0 = arith.constant 0 : index
    %c0_0 = arith.constant 0 : index
    %c0_1 = arith.constant 0 : index
    %0 = vector.load %arg1[%c0, %c0_0, %c0_1] : memref<1x32x128xf32, #tpu.memory_space<vmem>>, vector<1x32x128xf32>
    %1 = vector.shape_cast %0 : vector<1x32x128xf32> to vector<32x128xf32>
    %cst = arith.constant 0.000000e+00 : f32
    %2 = vector.broadcast %cst : f32 to vector<1x128xf32>
    %3 = tpu.concatenate %1, %2 in 0 : vector<32x128xf32>, vector<1x128xf32> -> vector<33x128xf32>
    %4 = vector.extract_strided_slice %3 {offsets = [1, 0], sizes = [32, 128], strides = [1, 1]} : vector<33x128xf32> to vector<32x128xf32>
    %5 = tpu.concatenate %1, %4 in 1 : vector<32x128xf32>, vector<32x128xf32> -> vector<32x256xf32>
    %6 = arith.truncf %5 : vector<32x256xf32> to vector<32x256xbf16>
    %c0_2 = arith.constant 0 : index
    %c0_3 = arith.constant 0 : index
    %7 = vector.load %arg2[%c0_2, %c0_3] : memref<1152x128xbf16, #tpu.memory_space<vmem>>, vector<256x128xbf16>
    %cst_4 = arith.constant dense<0.000000e+00> : vector<32x128xf32>
    %8 = tpu.matmul %6, %7, %cst_4 {dimension_numbers = #tpu.dot_dimension_numbers<[1], [0], [0], [1], [0, 0, 1, 1], [], []>} : vector<32x256xbf16>, vector<256x128xbf16>, vector<32x128xf32> -> vector<32x128xf32>
    %c0_5 = arith.constant 0 : index
    %c0_6 = arith.constant 0 : index
    %9 = vector.load %arg3[%c0_5, %c0_6] : memref<5x128xf32, #tpu.memory_space<vmem>>, vector<1x128xf32>
    %10 = vector.broadcast %9 : vector<1x128xf32> to vector<32x128xf32>
    %11 = arith.addf %8, %10 : vector<32x128xf32>
    %cst_7 = arith.constant 5.000000e-01 : f32
    %12 = vector.broadcast %cst_7 : f32 to vector<32x128xf32>
    %13 = arith.mulf %12, %11 : vector<32x128xf32>
    %cst_8 = arith.constant 0.707106769 : f32
    %14 = vector.broadcast %cst_8 : f32 to vector<32x128xf32>
    %15 = arith.mulf %11, %14 : vector<32x128xf32>
    %16 = math.erf %15 : vector<32x128xf32>
    %cst_9 = arith.constant 1.000000e+00 : f32
    %17 = vector.broadcast %cst_9 : f32 to vector<32x128xf32>
    %18 = arith.addf %17, %16 : vector<32x128xf32>
    %19 = arith.mulf %13, %18 : vector<32x128xf32>
    %cst_10 = arith.constant 0.000000e+00 : f32
    %20 = vector.broadcast %cst_10 : f32 to vector<2x128xf32>
    %21 = tpu.concatenate %19, %20 in 0 : vector<32x128xf32>, vector<2x128xf32> -> vector<34x128xf32>
    %22 = vector.extract_strided_slice %21 {offsets = [2, 0], sizes = [32, 128], strides = [1, 1]} : vector<34x128xf32> to vector<32x128xf32>
    %23 = tpu.concatenate %19, %22 in 1 : vector<32x128xf32>, vector<32x128xf32> -> vector<32x256xf32>
    %24 = arith.truncf %23 : vector<32x256xf32> to vector<32x256xbf16>
    %c256 = arith.constant 256 : index
    %c0_11 = arith.constant 0 : index
    %25 = vector.load %arg2[%c256, %c0_11] : memref<1152x128xbf16, #tpu.memory_space<vmem>>, vector<256x128xbf16>
    %cst_12 = arith.constant dense<0.000000e+00> : vector<32x128xf32>
    %26 = tpu.matmul %24, %25, %cst_12 {dimension_numbers = #tpu.dot_dimension_numbers<[1], [0], [0], [1], [0, 0, 1, 1], [], []>} : vector<32x256xbf16>, vector<256x128xbf16>, vector<32x128xf32> -> vector<32x128xf32>
    %c1 = arith.constant 1 : index
    %c0_13 = arith.constant 0 : index
    %27 = vector.load %arg3[%c1, %c0_13] : memref<5x128xf32, #tpu.memory_space<vmem>>, vector<1x128xf32>
    %28 = vector.broadcast %27 : vector<1x128xf32> to vector<32x128xf32>
    %29 = arith.addf %26, %28 : vector<32x128xf32>
    %cst_14 = arith.constant 5.000000e-01 : f32
    %30 = vector.broadcast %cst_14 : f32 to vector<32x128xf32>
    %31 = arith.mulf %30, %29 : vector<32x128xf32>
    %cst_15 = arith.constant 0.707106769 : f32
    %32 = vector.broadcast %cst_15 : f32 to vector<32x128xf32>
    %33 = arith.mulf %29, %32 : vector<32x128xf32>
    %34 = math.erf %33 : vector<32x128xf32>
    %cst_16 = arith.constant 1.000000e+00 : f32
    %35 = vector.broadcast %cst_16 : f32 to vector<32x128xf32>
    %36 = arith.addf %35, %34 : vector<32x128xf32>
    %37 = arith.mulf %31, %36 : vector<32x128xf32>
    %cst_17 = arith.constant 0.000000e+00 : f32
    %38 = vector.broadcast %cst_17 : f32 to vector<4x128xf32>
    %39 = tpu.concatenate %37, %38 in 0 : vector<32x128xf32>, vector<4x128xf32> -> vector<36x128xf32>
    %40 = vector.extract_strided_slice %39 {offsets = [4, 0], sizes = [32, 128], strides = [1, 1]} : vector<36x128xf32> to vector<32x128xf32>
    %41 = tpu.concatenate %37, %40 in 1 : vector<32x128xf32>, vector<32x128xf32> -> vector<32x256xf32>
    %42 = arith.truncf %41 : vector<32x256xf32> to vector<32x256xbf16>
    %c512 = arith.constant 512 : index
    %c0_18 = arith.constant 0 : index
    %43 = vector.load %arg2[%c512, %c0_18] : memref<1152x128xbf16, #tpu.memory_space<vmem>>, vector<256x128xbf16>
    %cst_19 = arith.constant dense<0.000000e+00> : vector<32x128xf32>
    %44 = tpu.matmul %42, %43, %cst_19 {dimension_numbers = #tpu.dot_dimension_numbers<[1], [0], [0], [1], [0, 0, 1, 1], [], []>} : vector<32x256xbf16>, vector<256x128xbf16>, vector<32x128xf32> -> vector<32x128xf32>
    %c2 = arith.constant 2 : index
    %c0_20 = arith.constant 0 : index
    %45 = vector.load %arg3[%c2, %c0_20] : memref<5x128xf32, #tpu.memory_space<vmem>>, vector<1x128xf32>
    %46 = vector.broadcast %45 : vector<1x128xf32> to vector<32x128xf32>
    %47 = arith.addf %44, %46 : vector<32x128xf32>
    %cst_21 = arith.constant 5.000000e-01 : f32
    %48 = vector.broadcast %cst_21 : f32 to vector<32x128xf32>
    %49 = arith.mulf %48, %47 : vector<32x128xf32>
    %cst_22 = arith.constant 0.707106769 : f32
    %50 = vector.broadcast %cst_22 : f32 to vector<32x128xf32>
    %51 = arith.mulf %47, %50 : vector<32x128xf32>
    %52 = math.erf %51 : vector<32x128xf32>
    %cst_23 = arith.constant 1.000000e+00 : f32
    %53 = vector.broadcast %cst_23 : f32 to vector<32x128xf32>
    %54 = arith.addf %53, %52 : vector<32x128xf32>
    %55 = arith.mulf %49, %54 : vector<32x128xf32>
    %cst_24 = arith.constant 0.000000e+00 : f32
    %56 = vector.broadcast %cst_24 : f32 to vector<8x128xf32>
    %57 = tpu.concatenate %55, %56 in 0 : vector<32x128xf32>, vector<8x128xf32> -> vector<40x128xf32>
    %58 = vector.extract_strided_slice %57 {offsets = [8, 0], sizes = [32, 128], strides = [1, 1]} : vector<40x128xf32> to vector<32x128xf32>
    %59 = tpu.concatenate %55, %58 in 1 : vector<32x128xf32>, vector<32x128xf32> -> vector<32x256xf32>
    %60 = arith.truncf %59 : vector<32x256xf32> to vector<32x256xbf16>
    %c768 = arith.constant 768 : index
    %c0_25 = arith.constant 0 : index
    %61 = vector.load %arg2[%c768, %c0_25] : memref<1152x128xbf16, #tpu.memory_space<vmem>>, vector<256x128xbf16>
    %cst_26 = arith.constant dense<0.000000e+00> : vector<32x128xf32>
    %62 = tpu.matmul %60, %61, %cst_26 {dimension_numbers = #tpu.dot_dimension_numbers<[1], [0], [0], [1], [0, 0, 1, 1], [], []>} : vector<32x256xbf16>, vector<256x128xbf16>, vector<32x128xf32> -> vector<32x128xf32>
    %c3 = arith.constant 3 : index
    %c0_27 = arith.constant 0 : index
    %63 = vector.load %arg3[%c3, %c0_27] : memref<5x128xf32, #tpu.memory_space<vmem>>, vector<1x128xf32>
    %64 = vector.broadcast %63 : vector<1x128xf32> to vector<32x128xf32>
    %65 = arith.addf %62, %64 : vector<32x128xf32>
    %cst_28 = arith.constant 5.000000e-01 : f32
    %66 = vector.broadcast %cst_28 : f32 to vector<32x128xf32>
    %67 = arith.mulf %66, %65 : vector<32x128xf32>
    %cst_29 = arith.constant 0.707106769 : f32
    %68 = vector.broadcast %cst_29 : f32 to vector<32x128xf32>
    %69 = arith.mulf %65, %68 : vector<32x128xf32>
    %70 = math.erf %69 : vector<32x128xf32>
    %cst_30 = arith.constant 1.000000e+00 : f32
    %71 = vector.broadcast %cst_30 : f32 to vector<32x128xf32>
    %72 = arith.addf %71, %70 : vector<32x128xf32>
    %73 = arith.mulf %67, %72 : vector<32x128xf32>
    %74 = arith.truncf %73 : vector<32x128xf32> to vector<32x128xbf16>
    %c1024 = arith.constant 1024 : index
    %c0_31 = arith.constant 0 : index
    %75 = vector.load %arg2[%c1024, %c0_31] : memref<1152x128xbf16, #tpu.memory_space<vmem>>, vector<128x128xbf16>
    %cst_32 = arith.constant dense<0.000000e+00> : vector<32x128xf32>
    %76 = tpu.matmul %74, %75, %cst_32 {dimension_numbers = #tpu.dot_dimension_numbers<[1], [0], [0], [1], [0, 0, 1, 1], [], []>} : vector<32x128xbf16>, vector<128x128xbf16>, vector<32x128xf32> -> vector<32x128xf32>
    %c4 = arith.constant 4 : index
    %c0_33 = arith.constant 0 : index
    %77 = vector.load %arg3[%c4, %c0_33] : memref<5x128xf32, #tpu.memory_space<vmem>>, vector<1x128xf32>
    %78 = vector.broadcast %77 : vector<1x128xf32> to vector<32x128xf32>
    %79 = arith.addf %76, %78 : vector<32x128xf32>
    %80 = vector.extract_strided_slice %79 {offsets = [0, 0], sizes = [16, 128], strides = [1, 1]} : vector<32x128xf32> to vector<16x128xf32>
    %c0_34 = arith.constant 0 : index
    %c0_35 = arith.constant 0 : index
    %c0_36 = arith.constant 0 : index
    %81 = vector.load %arg4[%c0_34, %c0_35, %c0_36] : memref<1x16x128xf32, #tpu.memory_space<vmem>>, vector<1x16x128xf32>
    %82 = vector.shape_cast %81 : vector<1x16x128xf32> to vector<16x128xf32>
    %83 = vector.shape_cast %80 : vector<16x128xf32> to vector<1x16x128xf32>
    tpu.vector_store %arg4[%c0_34, %c0_35, %c0_36], %83 {strides = array<i32>} : memref<1x16x128xf32, #tpu.memory_space<vmem>>, vector<1x16x128xf32>,
    return
  }
  func.func @transform_0(%arg0: i32) -> (i32, i32, i32) {
    %c0_i32 = arith.constant 0 : i32
    %c0_i32_0 = arith.constant 0 : i32
    %c0_i32_1 = arith.constant 0 : i32
    return %arg0, %c0_i32, %c0_i32_0 : i32, i32, i32
  }
  func.func @transform_1(%arg0: i32) -> (i32, i32) {
    %c0_i32 = arith.constant 0 : i32
    %c0_i32_0 = arith.constant 0 : i32
    %c0_i32_1 = arith.constant 0 : i32
    return %c0_i32, %c0_i32_0 : i32, i32
  }
  func.func @transform_2(%arg0: i32) -> (i32, i32) {
    %c0_i32 = arith.constant 0 : i32
    %c0_i32_0 = arith.constant 0 : i32
    %c0_i32_1 = arith.constant 0 : i32
    return %c0_i32, %c0_i32_0 : i32, i32
  }
  func.func @transform_3(%arg0: i32) -> (i32, i32, i32) {
    %c0_i32 = arith.constant 0 : i32
    %c0_i32_0 = arith.constant 0 : i32
    %c0_i32_1 = arith.constant 0 : i32
    return %arg0, %c0_i32, %c0_i32_0 : i32, i32, i32
  }
}

</mosaic_0001>

<llo_original>
// kernel: cnnb_forward.1
$region0: #{cnnb_forward.1}
  #allocation0 [shape = 'u32[]', space=smem, size = 0x4, offset = 0x4, fixed_abs, tag = 'smem constant byte address 0x4 - core index']
  #allocation1 [shape = 'u32[144,128]{1,0:T(1,128)}', space=vmem, size = 0x12000, scoped, tag = 'internal scratch']
  %s0 = inlined_call_operand.vmem [shape: f32[2,32,128], index: 0, kind: input, shape index: {}]
  %s1 = inlined_call_operand.vmem [shape: bf16[1152,128], index: 1, kind: input, shape index: {}]
  %s2 = inlined_call_operand.vmem [shape: f32[5,128], index: 2, kind: input, shape index: {}]
  %s3 = inlined_call_operand.vmem [shape: f32[2,16,128], index: 3, kind: output, shape index: {}]
  %s4 = sld [smem:[#allocation0]]
  $region45: #{cnnb_forward.1} parent=0
    _
  %s6 = ssub.s32 1, %s4
  %s7 = scalar_select 0, %s6, %s4
  loop: start=0, step=1, limit=4
  $region2: #{cnnb_forward.1} parent=0 // loop_pre_header
    _
  $region3: #{cnnb_forward.1} parent=0 // loop_header
    %s9 = sphi 0, %s13
    %p10 = scmp.ge.s32.totalorder %s9, 4
    %s19 = sphi 0, %s21
    %s22 = sphi 0, %s19
    %s23 = sphi 0, %s22
    %s39 = sphi 0, %s23
    %s43 = sphi 0, %s43
    %s45 = sphi 0, %s43
    %s46 = sphi 0, %s45
    %s60 = sphi 0, %s46
    %s64 = sphi 0, %s64
    %s66 = sphi 0, %s64
    %s67 = sphi 0, %s66
    %s81 = sphi 0, %s67
    %s87 = sphi 0, %s89
    %s90 = sphi 0, %s87
    %s91 = sphi 0, %s90
    %s107 = sphi 0, %s91
  $region4: #{cnnb_forward.1} parent=0 // loop_header_branch
    %12 = sbr.rel (%p10) target = $region8
  $region5: #{cnnb_forward.1} parent=0 // loop_body
    %s14 = ssub.s32 %s9, 1
    %s15 = ssub.s32 %s9, 2
    %s16 = sadd.s32 %s9, 1
    %s17 = ssub.s32 %s9, %s16
    %p18 = scmp.eq.s32.totalorder %s17, 0
    %s20 = sadd.s32 %s19, 1
    %s21 = scalar_select %p18, %s19, %s20
    %p24 = pneg %p18
    %p25 = scmp.eq.s32.totalorder %s9, 1
    %p26 = por %p24, %p25
    %p27 = scmp.ne.s32.totalorder %s19, %s22
    %p28 = scmp.eq.s32.totalorder %s9, 0
    %p29 = por %p27, %p28
    %p30 = scmp.ne.s32.totalorder %s19, %s22
    %p31 = scmp.eq.s32.totalorder %s14, 1
    %p32 = por %p30, %p31
    %p33 = scmp.ne.s32.totalorder %s22, %s23
    %p34 = scmp.eq.s32.totalorder %s14, 0
    %p35 = por %p33, %p34
    %p36 = scmp.ne.s32.totalorder %s22, %s23
    %p37 = scmp.eq.s32.totalorder %s15, 1
    %p38 = por %p36, %p37
    %p40 = scmp.ne.s32.totalorder %s23, %s39
    %p41 = scmp.eq.s32.totalorder %s15, 0
    %p42 = por %p40, %p41
    %s44 = sadd.s32 %s43, 1
    %p47 = scmp.eq.s32.totalorder %s9, 1
    %p48 = scmp.ne.s32.totalorder %s43, %s45
    %p49 = scmp.eq.s32.totalorder %s9, 0
    %p50 = por %p48, %p49
    %p51 = scmp.ne.s32.totalorder %s43, %s45
    %p52 = scmp.eq.s32.totalorder %s14, 1
    %p53 = por %p51, %p52
    %p54 = scmp.ne.s32.totalorder %s45, %s46
    %p55 = scmp.eq.s32.totalorder %s14, 0
    %p56 = por %p54, %p55
    %p57 = scmp.ne.s32.totalorder %s45, %s46
    %p58 = scmp.eq.s32.totalorder %s15, 1
    %p59 = por %p57, %p58
    %p61 = scmp.ne.s32.totalorder %s46, %s60
    %p62 = scmp.eq.s32.totalorder %s15, 0
    %p63 = por %p61, %p62
    %s65 = sadd.s32 %s64, 1
    %p68 = scmp.eq.s32.totalorder %s9, 1
    %p69 = scmp.ne.s32.totalorder %s64, %s66
    %p70 = scmp.eq.s32.totalorder %s9, 0
    %p71 = por %p69, %p70
    %p72 = scmp.ne.s32.totalorder %s64, %s66
    %p73 = scmp.eq.s32.totalorder %s14, 1
    %p74 = por %p72, %p73
    %p75 = scmp.ne.s32.totalorder %s66, %s67
    %p76 = scmp.eq.s32.totalorder %s14, 0
    %p77 = por %p75, %p76
    %p78 = scmp.ne.s32.totalorder %s66, %s67
    %p79 = scmp.eq.s32.totalorder %s15, 1
    %p80 = por %p78, %p79
    %p82 = scmp.ne.s32.totalorder %s67, %s81
    %p83 = scmp.eq.s32.totalorder %s15, 0
    %p84 = por %p82, %p83
    %s85 = ssub.s32 %s9, %s16
    %p86 = scmp.eq.s32.totalorder %s85, 0
    %s88 = sadd.s32 %s87, 1
    %s89 = scalar_select %p86, %s87, %s88
    %p92 = pneg %p86
    %p93 = scmp.eq.s32.totalorder %s9, 1
    %p94 = por %p92, %p93
    %p95 = scmp.ne.s32.totalorder %s87, %s90
    %p96 = scmp.eq.s32.totalorder %s9, 0
    %p97 = por %p95, %p96
    %p98 = scmp.ne.s32.totalorder %s87, %s90
    %p99 = scmp.eq.s32.totalorder %s14, 1
    %p100 = por %p98, %p99
    %p101 = scmp.ne.s32.totalorder %s90, %s91
    %p102 = scmp.eq.s32.totalorder %s14, 0
    %p103 = por %p101, %p102
    %p104 = scmp.ne.s32.totalorder %s90, %s91
    %p105 = scmp.eq.s32.totalorder %s15, 1
    %p106 = por %p104, %p105
    %p108 = scmp.ne.s32.totalorder %s91, %s107
    %p109 = scmp.eq.s32.totalorder %s15, 0
    %p110 = por %p108, %p109
    %p111 = scmp.le.s32.totalorder 1, %s9
    %p112 = scmp.lt.s32.totalorder %s9, 3
    %p113 = pnand %p111, %p112
    %p114 = pneg %p113
    // Predicated region
    $region9: #{cnnb_forward.1} parent=5 // pred_check
      _
    $region10: #{cnnb_forward.1} parent=5 // pred_check_branch
      %116 = sbr.rel (%p113) target = $region12
    $region11: #{cnnb_forward.1} parent=5 // pred_region
      %s117 = ssub.s32 %s9, 1
      // Predicated region
      $region13: #{cnnb_forward.1} parent=11 // pred_check
        %p118 = pneg %p56
      $region14: #{cnnb_forward.1} parent=11 // pred_check_branch
        %120 = sbr.rel (%p118) target = $region16
      $region15: #{cnnb_forward.1} parent=11 // pred_region
        _
      $region16: #{cnnb_forward.1} parent=11 // pred_fallthru
        _
      // Predicated region
      $region17: #{cnnb_forward.1} parent=11 // pred_check
        %p121 = pneg %p77
      $region18: #{cnnb_forward.1} parent=11 // pred_check_branch
        %123 = sbr.rel (%p121) target = $region20
      $region19: #{cnnb_forward.1} parent=11 // pred_region
        _
      $region20: #{cnnb_forward.1} parent=11 // pred_fallthru
        _
    $region12: #{cnnb_forward.1} parent=5 // pred_fallthru
      _
    %p124 = scmp.lt.s32.totalorder %s9, 2
    // Predicated region
    $region21: #{cnnb_forward.1} parent=5 // pred_check
      %p125 = pneg %p124
    $region22: #{cnnb_forward.1} parent=5 // pred_check_branch
      %127 = sbr.rel (%p125) target = $region24
    $region23: #{cnnb_forward.1} parent=5 // pred_region
      // Predicated region
      $region25: #{cnnb_forward.1} parent=23 // pred_check
        %p128 = pneg %p29
      $region26: #{cnnb_forward.1} parent=23 // pred_check_branch
        %130 = sbr.rel (%p128) target = $region28
      $region27: #{cnnb_forward.1} parent=23 // pred_region
        %p131 = scmp.lt.s32.totalorder %s9, 1
        %s132 = scalar_select %p131, %s9, 1
        %s133 = smul.addr %s132, 4
        %s134 = smul.addr %s133, 8
        %s135 = scalar_lea.vmem %s0, %s134
      $region28: #{cnnb_forward.1} parent=23 // pred_fallthru
        _
    $region24: #{cnnb_forward.1} parent=5 // pred_fallthru
      _
    %p136 = scmp.le.s32.totalorder 1, %s9
    %p137 = scmp.lt.s32.totalorder %s9, 3
    %p138 = pnand %p136, %p137
    %p139 = pneg %p138
    // Predicated region
    $region29: #{cnnb_forward.1} parent=5 // pred_check
      _
    $region30: #{cnnb_forward.1} parent=5 // pred_check_branch
      %141 = sbr.rel (%p138) target = $region32
    $region31: #{cnnb_forward.1} parent=5 // pred_region
      %s142 = ssub.s32 %s9, 1
      %p143 = scmp.lt.s32.totalorder %s14, 1
      %s144 = scalar_select %p143, %s14, 1
      %s145 = smul.addr %s144, 4
      %s146 = smul.addr %s145, 8
      %s147 = scalar_lea.vmem %s0, %s146
      %p148 = pneg %p35
      %p149 = pneg %p32
      %p150 = pneg %p56
      %p151 = pneg %p53
      %p152 = pneg %p77
      %p153 = pneg %p74
      %p154 = pneg %p103
      %p155 = pneg %p100
      %p156 = scmp.lt.s32.totalorder %s14, 1
      %s157 = scalar_select %p156, %s14, 1
      %s158 = smul.addr %s157, 2
      %s159 = smul.addr %s158, 8
      %s160 = scalar_lea.vmem %s3, %s159
      %p161 = scmp.lt.s32.totalorder %s14, 1
      %s162 = scalar_select %p161, %s14, 1
      %s163 = smul.addr %s162, 4
      %s164 = smul.addr %s163, 8
      %s165 = scalar_lea.vmem %s0, %s164
      %p166 = scmp.lt.s32.totalorder %s14, 1
      %s167 = scalar_select %p166, %s14, 1
      %s168 = smul.addr %s167, 2
      %s169 = smul.addr %s168, 8
      %s170 = scalar_lea.vmem %s3, %s169
      %v172 = vld [vmem:[%s165] sm:$0xff]
      %v173 = vld [vmem:[%s165 + $0x8] sm:$0xff]
      %v174 = vld [vmem:[%s165 + $0x10] sm:$0xff]
      %v175 = vld [vmem:[%s165 + $0x18] sm:$0xff]
      %vm181 = vcmask 1046528
      %v182 = vrot.slane %v172, 1
      %v183 = vrot.slane %v173, 1
      %v184 = vsel %vm181, %v182, %v183
      %v185 = vrot.slane %v174, 1
      %v186 = vsel %vm181, %v183, %v185
      %v187 = vrot.slane %v175, 1
      %v188 = vsel %vm181, %v185, %v187
      %v189 = vrot.slane 0.0, 1
      %v190 = vsel %vm181, %v187, %v189
      %v195 = vpack.c.bf16 %v173, %v172
      %v196 = vpack.c.bf16 %v186, %v184
      %v197 = vpack.c.bf16 %v175, %v174
      %v198 = vpack.c.bf16 %v190, %v188
      %v199 = vld [vmem:[%s1] sm:$0xf]
      %v200 = vld [vmem:[%s1 + $0x4] sm:$0xf]
      %v201 = vld [vmem:[%s1 + $0x8] sm:$0xf]
      %v202 = vld [vmem:[%s1 + $0xc] sm:$0xf]
      %v203 = vld [vmem:[%s1 + $0x10] sm:$0xf]
      %v204 = vld [vmem:[%s1 + $0x14] sm:$0xf]
      %v205 = vld [vmem:[%s1 + $0x18] sm:$0xf]
      %v206 = vld [vmem:[%s1 + $0x1c] sm:$0xf]
      %v207 = vld [vmem:[%s1 + $0x20] sm:$0xf]
      %v208 = vld [vmem:[%s1 + $0x24] sm:$0xf]
      %v209 = vld [vmem:[%s1 + $0x28] sm:$0xf]
      %v210 = vld [vmem:[%s1 + $0x2c] sm:$0xf]
      %v211 = vld [vmem:[%s1 + $0x30] sm:$0xf]
      %v212 = vld [vmem:[%s1 + $0x34] sm:$0xf]
      %v213 = vld [vmem:[%s1 + $0x38] sm:$0xf]
      %v214 = vld [vmem:[%s1 + $0x3c] sm:$0xf]
      %v215 = vld [vmem:[%s1 + $0x40] sm:$0xf]
      %v216 = vld [vmem:[%s1 + $0x44] sm:$0xf]
      %v217 = vld [vmem:[%s1 + $0x48] sm:$0xf]
      %v218 = vld [vmem:[%s1 + $0x4c] sm:$0xf]
      %v219 = vld [vmem:[%s1 + $0x50] sm:$0xf]
      %v220 = vld [vmem:[%s1 + $0x54] sm:$0xf]
      %v221 = vld [vmem:[%s1 + $0x58] sm:$0xf]
      %v222 = vld [vmem:[%s1 + $0x5c] sm:$0xf]
      %v223 = vld [vmem:[%s1 + $0x60] sm:$0xf]
      %v224 = vld [vmem:[%s1 + $0x64] sm:$0xf]
      %v225 = vld [vmem:[%s1 + $0x68] sm:$0xf]
      %v226 = vld [vmem:[%s1 + $0x6c] sm:$0xf]
      %v227 = vld [vmem:[%s1 + $0x70] sm:$0xf]
      %v228 = vld [vmem:[%s1 + $0x74] sm:$0xf]
      %v229 = vld [vmem:[%s1 + $0x78] sm:$0xf]
      %v230 = vld [vmem:[%s1 + $0x7c] sm:$0xf]
      %v231 = vld [vmem:[%s2] sm:$0x1]
      %v232 = vlaneseq
      %v233 = vshrl.u32 %v232, 7
      %v234 = vsub.s32 0, %v233
      %v235 = vrot.slane %v231, %v234
      %v268 = vunpack.c.l.b16 %v199
      %v269 = vunpack.c.l.b16 %v200
      %v270 = vunpack.c.l.b16 %v201
      %v271 = vunpack.c.l.b16 %v202
      %v272 = vunpack.c.l.b16 %v203
      %v273 = vunpack.c.l.b16 %v204
      %v274 = vunpack.c.l.b16 %v205
      %v275 = vunpack.c.l.b16 %v206
      %v276 = vunpack.c.l.b16 %v207
      %v277 = vunpack.c.l.b16 %v208
      %v278 = vunpack.c.l.b16 %v209
      %v279 = vunpack.c.l.b16 %v210
      %v280 = vunpack.c.l.b16 %v211
      %v281 = vunpack.c.l.b16 %v212
      %v282 = vunpack.c.l.b16 %v213
      %v283 = vunpack.c.l.b16 %v214
      %v284 = vunpack.c.l.b16 %v215
      %v285 = vunpack.c.l.b16 %v216
      %v286 = vunpack.c.l.b16 %v217
      %v287 = vunpack.c.l.b16 %v218
      %v288 = vunpack.c.l.b16 %v219
      %v289 = vunpack.c.l.b16 %v220
      %v290 = vunpack.c.l.b16 %v221
      %v291 = vunpack.c.l.b16 %v222
      %v292 = vunpack.c.l.b16 %v223
      %v293 = vunpack.c.l.b16 %v224
      %v294 = vunpack.c.l.b16 %v225
      %v295 = vunpack.c.l.b16 %v226
      %v296 = vunpack.c.l.b16 %v227
      %v297 = vunpack.c.l.b16 %v228
      %v298 = vunpack.c.l.b16 %v229
      %v299 = vunpack.c.l.b16 %v230
      %v300 = vpack.c.b16 %v269, %v268
      %v301 = vpack.c.b16 %v271, %v270
      %v302 = vpack.c.b16 %v273, %v272
      %v303 = vpack.c.b16 %v275, %v274
      %v304 = vpack.c.b16 %v277, %v276
      %v305 = vpack.c.b16 %v279, %v278
      %v306 = vpack.c.b16 %v281, %v280
      %v307 = vpack.c.b16 %v283, %v282
      %v308 = vpack.c.b16 %v285, %v284
      %v309 = vpack.c.b16 %v287, %v286
      %v310 = vpack.c.b16 %v289, %v288
      %v311 = vpack.c.b16 %v291, %v290
      %v312 = vpack.c.b16 %v293, %v292
      %v313 = vpack.c.b16 %v295, %v294
      %v314 = vpack.c.b16 %v297, %v296
      %v315 = vpack.c.b16 %v299, %v298
      %332 = vmatprep.subr.bf16.mxu0 0
      %333 = vmatpush1.bf16.msra.mxu0 %v300
      %334 = vmatprep.subr.bf16.mxu0 0
      %335 = vmatpush1.bf16.msra.mxu0 %v301
      %336 = vmatprep.subr.bf16.mxu0 0
      %337 = vmatpush1.bf16.msra.mxu0 %v302
      %338 = vmatprep.subr.bf16.mxu0 0
      %339 = vmatpush1.bf16.msra.mxu0 %v303
      %340 = vmatprep.subr.bf16.mxu0 0
      %341 = vmatpush1.bf16.msra.mxu0 %v304
      %342 = vmatprep.subr.bf16.mxu0 0
      %343 = vmatpush1.bf16.msra.mxu0 %v305
      %344 = vmatprep.subr.bf16.mxu0 0
      %345 = vmatpush1.bf16.msra.mxu0 %v306
      %346 = vmatprep.subr.bf16.mxu0 0
      %347 = vmatpush1.bf16.msra.mxu0 %v307
      %348 = vmatprep.subr.bf16.mxu0 0
      %349 = vmatpush1.bf16.msra.mxu0 %v308
      %350 = vmatprep.subr.bf16.mxu0 0
      %351 = vmatpush1.bf16.msra.mxu0 %v309
      %352 = vmatprep.subr.bf16.mxu0 0
      %353 = vmatpush1.bf16.msra.mxu0 %v310
      %354 = vmatprep.subr.bf16.mxu0 0
      %355 = vmatpush1.bf16.msra.mxu0 %v311
      %356 = vmatprep.subr.bf16.mxu0 0
      %357 = vmatpush1.bf16.msra.mxu0 %v312
      %358 = vmatprep.subr.bf16.mxu0 0
      %359 = vmatpush1.bf16.msra.mxu0 %v313
      %360 = vmatprep.subr.bf16.mxu0 0
      %361 = vmatpush1.bf16.msra.mxu0 %v314
      %362 = vmatprep.subr.bf16.mxu0 0
      %363 = vmatpush1.bf16.msra.mxu0 %v315
      %364 = vmatprep.mubr.bf16.mxu0 %v196
      %365 = vmatmul.mubr.bf16.gmra.mrb[0].mxu0 %v195
      %v366 = vpop.f32.mrb[0].mxu0
      %v367 = vadd.f32 %v235, %v366
      %v368 = vpop.f32.mrb[0].mxu0
      %v369 = vpop.f32.mrb[0].mxu0
      %v370 = vadd.f32 %v235, %v369
      %v371 = vpop.f32.mrb[0].mxu0
      %372 = vmatprep.mubr.bf16.mxu0 %v198
      %373 = vmatmul.mubr.bf16.gmra.mrb[0].mxu0 %v197
      %v374 = vpop.f32.mrb[0].mxu0
      %v375 = vadd.f32 %v235, %v374
      %v376 = vpop.f32.mrb[0].mxu0
      %v377 = vpop.f32.mrb[0].mxu0
      %v378 = vadd.f32 %v235, %v377
      %v379 = vpop.f32.mrb[0].mxu0
      %380 = vdwg.mxu0
      %v381 = vmul.f32 %v367, 0.5
      %v382 = vmul.f32 %v370, 0.5
      %v383 = vmul.f32 %v375, 0.5
      %v384 = vmul.f32 %v378, 0.5
      %v385 = vmul.f32 %v367, 0.70710677
      %v386 = vmul.f32 %v370, 0.70710677
      %v387 = vmul.f32 %v375, 0.70710677
      %v388 = vmul.f32 %v378, 0.70710677
      %v389 = verf.f32.pop %v385
      %v390 = verf.f32.pop %v386
      %v391 = verf.f32.pop %v387
      %v392 = verf.f32.pop %v388
      %v393 = vadd.f32 %v389, 1.0
      %v394 = vadd.f32 %v390, 1.0
      %v395 = vadd.f32 %v391, 1.0
      %v396 = vadd.f32 %v392, 1.0
      %v397 = vmul.f32 %v381, %v393
      %v398 = vmul.f32 %v382, %v394
      %v399 = vmul.f32 %v383, %v395
      %v400 = vmul.f32 %v384, %v396
      %vm405 = vcmask 1045504
      %v406 = vrot.slane %v397, 2
      %v407 = vrot.slane %v398, 2
      %v408 = vsel %vm405, %v406, %v407
      %v409 = vrot.slane %v399, 2
      %v410 = vsel %vm405, %v407, %v409
      %v411 = vrot.slane %v400, 2
      %v412 = vsel %vm405, %v409, %v411
      %v413 = vrot.slane 0.0, 2
      %v414 = vsel %vm405, %v411, %v413
      %v419 = vpack.c.bf16 %v398, %v397
      %v420 = vpack.c.bf16 %v410, %v408
      %v421 = vpack.c.bf16 %v400, %v399
      %v422 = vpack.c.bf16 %v414, %v412
      %v423 = vld [vmem:[%s1 + $0x80] sm:$0xf]
      %v424 = vld [vmem:[%s1 + $0x84] sm:$0xf]
      %v425 = vld [vmem:[%s1 + $0x88] sm:$0xf]
      %v426 = vld [vmem:[%s1 + $0x8c] sm:$0xf]
      %v427 = vld [vmem:[%s1 + $0x90] sm:$0xf]
      %v428 = vld [vmem:[%s1 + $0x94] sm:$0xf]
      %v429 = vld [vmem:[%s1 + $0x98] sm:$0xf]
      %v430 = vld [vmem:[%s1 + $0x9c] sm:$0xf]
      %v431 = vld [vmem:[%s1 + $0xa0] sm:$0xf]
      %v432 = vld [vmem:[%s1 + $0xa4] sm:$0xf]
      %v433 = vld [vmem:[%s1 + $0xa8] sm:$0xf]
      %v434 = vld [vmem:[%s1 + $0xac] sm:$0xf]
      %v435 = vld [vmem:[%s1 + $0xb0] sm:$0xf]
      %v436 = vld [vmem:[%s1 + $0xb4] sm:$0xf]
      %v437 = vld [vmem:[%s1 + $0xb8] sm:$0xf]
      %v438 = vld [vmem:[%s1 + $0xbc] sm:$0xf]
      %v439 = vld [vmem:[%s1 + $0xc0] sm:$0xf]
      %v440 = vld [vmem:[%s1 + $0xc4] sm:$0xf]
      %v441 = vld [vmem:[%s1 + $0xc8] sm:$0xf]
      %v442 = vld [vmem:[%s1 + $0xcc] sm:$0xf]
      %v443 = vld [vmem:[%s1 + $0xd0] sm:$0xf]
      %v444 = vld [vmem:[%s1 + $0xd4] sm:$0xf]
      %v445 = vld [vmem:[%s1 + $0xd8] sm:$0xf]
      %v446 = vld [vmem:[%s1 + $0xdc] sm:$0xf]
      %v447 = vld [vmem:[%s1 + $0xe0] sm:$0xf]
      %v448 = vld [vmem:[%s1 + $0xe4] sm:$0xf]
      %v449 = vld [vmem:[%s1 + $0xe8] sm:$0xf]
      %v450 = vld [vmem:[%s1 + $0xec] sm:$0xf]
      %v451 = vld [vmem:[%s1 + $0xf0] sm:$0xf]
      %v452 = vld [vmem:[%s1 + $0xf4] sm:$0xf]
      %v453 = vld [vmem:[%s1 + $0xf8] sm:$0xf]
      %v454 = vld [vmem:[%s1 + $0xfc] sm:$0xf]
      %v455 = vld [vmem:[%s2 + $0x1] sm:$0x1]
      %v456 = vlaneseq
      %v457 = vshrl.u32 %v456, 7
      %v458 = vsub.s32 0, %v457
      %v459 = vrot.slane %v455, %v458
      %v492 = vunpack.c.l.b16 %v423
      %v493 = vunpack.c.l.b16 %v424
      %v494 = vunpack.c.l.b16 %v425
      %v495 = vunpack.c.l.b16 %v426
      %v496 = vunpack.c.l.b16 %v427
      %v497 = vunpack.c.l.b16 %v428
      %v498 = vunpack.c.l.b16 %v429
      %v499 = vunpack.c.l.b16 %v430
      %v500 = vunpack.c.l.b16 %v431
      %v501 = vunpack.c.l.b16 %v432
      %v502 = vunpack.c.l.b16 %v433
      %v503 = vunpack.c.l.b16 %v434
      %v504 = vunpack.c.l.b16 %v435
      %v505 = vunpack.c.l.b16 %v436
      %v506 = vunpack.c.l.b16 %v437
      %v507 = vunpack.c.l.b16 %v438
      %v508 = vunpack.c.l.b16 %v439
      %v509 = vunpack.c.l.b16 %v440
      %v510 = vunpack.c.l.b16 %v441
      %v511 = vunpack.c.l.b16 %v442
      %v512 = vunpack.c.l.b16 %v443
      %v513 = vunpack.c.l.b16 %v444
      %v514 = vunpack.c.l.b16 %v445
      %v515 = vunpack.c.l.b16 %v446
      %v516 = vunpack.c.l.b16 %v447
      %v517 = vunpack.c.l.b16 %v448
      %v518 = vunpack.c.l.b16 %v449
      %v519 = vunpack.c.l.b16 %v450
      %v520 = vunpack.c.l.b16 %v451
      %v521 = vunpack.c.l.b16 %v452
      %v522 = vunpack.c.l.b16 %v453
      %v523 = vunpack.c.l.b16 %v454
      %v524 = vpack.c.b16 %v493, %v492
      %v525 = vpack.c.b16 %v495, %v494
      %v526 = vpack.c.b16 %v497, %v496
      %v527 = vpack.c.b16 %v499, %v498
      %v528 = vpack.c.b16 %v501, %v500
      %v529 = vpack.c.b16 %v503, %v502
      %v530 = vpack.c.b16 %v505, %v504
      %v531 = vpack.c.b16 %v507, %v506
      %v532 = vpack.c.b16 %v509, %v508
      %v533 = vpack.c.b16 %v511, %v510
      %v534 = vpack.c.b16 %v513, %v512
      %v535 = vpack.c.b16 %v515, %v514
      %v536 = vpack.c.b16 %v517, %v516
      %v537 = vpack.c.b16 %v519, %v518
      %v538 = vpack.c.b16 %v521, %v520
      %v539 = vpack.c.b16 %v523, %v522
      %556 = vmatprep.subr.bf16.mxu0 0
      %557 = vmatpush1.bf16.msra.mxu0 %v524
      %558 = vmatprep.subr.bf16.mxu0 0
      %559 = vmatpush1.bf16.msra.mxu0 %v525
      %560 = vmatprep.subr.bf16.mxu0 0
      %561 = vmatpush1.bf16.msra.mxu0 %v526
      %562 = vmatprep.subr.bf16.mxu0 0
      %563 = vmatpush1.bf16.msra.mxu0 %v527
      %564 = vmatprep.subr.bf16.mxu0 0
      %565 = vmatpush1.bf16.msra.mxu0 %v528
      %566 = vmatprep.subr.bf16.mxu0 0
      %567 = vmatpush1.bf16.msra.mxu0 %v529
      %568 = vmatprep.subr.bf16.mxu0 0
      %569 = vmatpush1.bf16.msra.mxu0 %v530
      %570 = vmatprep.subr.bf16.mxu0 0
      %571 = vmatpush1.bf16.msra.mxu0 %v531
      %572 = vmatprep.subr.bf16.mxu0 0
      %573 = vmatpush1.bf16.msra.mxu0 %v532
      %574 = vmatprep.subr.bf16.mxu0 0
      %575 = vmatpush1.bf16.msra.mxu0 %v533
      %576 = vmatprep.subr.bf16.mxu0 0
      %577 = vmatpush1.bf16.msra.mxu0 %v534
      %578 = vmatprep.subr.bf16.mxu0 0
      %579 = vmatpush1.bf16.msra.mxu0 %v535
      %580 = vmatprep.subr.bf16.mxu0 0
      %581 = vmatpush1.bf16.msra.mxu0 %v536
      %582 = vmatprep.subr.bf16.mxu0 0
      %583 = vmatpush1.bf16.msra.mxu0 %v537
      %584 = vmatprep.subr.bf16.mxu0 0
      %585 = vmatpush1.bf16.msra.mxu0 %v538
      %586 = vmatprep.subr.bf16.mxu0 0
      %587 = vmatpush1.bf16.msra.mxu0 %v539
      %588 = vmatprep.mubr.bf16.mxu0 %v420
      %589 = vmatmul.mubr.bf16.gmra.mrb[0].mxu0 %v419
      %v590 = vpop.f32.mrb[0].mxu0
      %v591 = vadd.f32 %v459, %v590
      %v592 = vpop.f32.mrb[0].mxu0
      %v593 = vpop.f32.mrb[0].mxu0
      %v594 = vadd.f32 %v459, %v593
      %v595 = vpop.f32.mrb[0].mxu0
      %596 = vmatprep.mubr.bf16.mxu0 %v422
      %597 = vmatmul.mubr.bf16.gmra.mrb[0].mxu0 %v421
      %v598 = vpop.f32.mrb[0].mxu0
      %v599 = vadd.f32 %v459, %v598
      %v600 = vpop.f32.mrb[0].mxu0
      %v601 = vpop.f32.mrb[0].mxu0
      %v602 = vadd.f32 %v459, %v601
      %v603 = vpop.f32.mrb[0].mxu0
      %604 = vdwg.mxu0
      %v605 = vmul.f32 %v591, 0.5
      %v606 = vmul.f32 %v594, 0.5
      %v607 = vmul.f32 %v599, 0.5
      %v608 = vmul.f32 %v602, 0.5
      %v609 = vmul.f32 %v591, 0.70710677
      %v610 = vmul.f32 %v594, 0.70710677
      %v611 = vmul.f32 %v599, 0.70710677
      %v612 = vmul.f32 %v602, 0.70710677
      %v613 = verf.f32.pop %v609
      %v614 = verf.f32.pop %v610
      %v615 = verf.f32.pop %v611
      %v616 = verf.f32.pop %v612
      %v617 = vadd.f32 %v613, 1.0
      %v618 = vadd.f32 %v614, 1.0
      %v619 = vadd.f32 %v615, 1.0
      %v620 = vadd.f32 %v616, 1.0
      %v621 = vmul.f32 %v605, %v617
      %v622 = vmul.f32 %v606, %v618
      %v623 = vmul.f32 %v607, %v619
      %v624 = vmul.f32 %v608, %v620
      %vm629 = vcmask 1043456
      %v630 = vrot.slane %v621, 4
      %v631 = vrot.slane %v622, 4
      %v632 = vsel %vm629, %v630, %v631
      %v633 = vrot.slane %v623, 4
      %v634 = vsel %vm629, %v631, %v633
      %v635 = vrot.slane %v624, 4
      %v636 = vsel %vm629, %v633, %v635
      %v637 = vrot.slane 0.0, 4
      %v638 = vsel %vm629, %v635, %v637
      %v643 = vpack.c.bf16 %v622, %v621
      %v644 = vpack.c.bf16 %v634, %v632
      %v645 = vpack.c.bf16 %v624, %v623
      %v646 = vpack.c.bf16 %v638, %v636
      %v647 = vld [vmem:[%s1 + $0x100] sm:$0xf]
      %v648 = vld [vmem:[%s1 + $0x104] sm:$0xf]
      %v649 = vld [vmem:[%s1 + $0x108] sm:$0xf]
      %v650 = vld [vmem:[%s1 + $0x10c] sm:$0xf]
      %v651 = vld [vmem:[%s1 + $0x110] sm:$0xf]
      %v652 = vld [vmem:[%s1 + $0x114] sm:$0xf]
      %v653 = vld [vmem:[%s1 + $0x118] sm:$0xf]
      %v654 = vld [vmem:[%s1 + $0x11c] sm:$0xf]
      %v655 = vld [vmem:[%s1 + $0x120] sm:$0xf]
      %v656 = vld [vmem:[%s1 + $0x124] sm:$0xf]
      %v657 = vld [vmem:[%s1 + $0x128] sm:$0xf]
      %v658 = vld [vmem:[%s1 + $0x12c] sm:$0xf]
      %v659 = vld [vmem:[%s1 + $0x130] sm:$0xf]
      %v660 = vld [vmem:[%s1 + $0x134] sm:$0xf]
      %v661 = vld [vmem:[%s1 + $0x138] sm:$0xf]
      %v662 = vld [vmem:[%s1 + $0x13c] sm:$0xf]
      %v663 = vld [vmem:[%s1 + $0x140] sm:$0xf]
      %v664 = vld [vmem:[%s1 + $0x144] sm:$0xf]
      %v665 = vld [vmem:[%s1 + $0x148] sm:$0xf]
      %v666 = vld [vmem:[%s1 + $0x14c] sm:$0xf]
      %v667 = vld [vmem:[%s1 + $0x150] sm:$0xf]
      %v668 = vld [vmem:[%s1 + $0x154] sm:$0xf]
      %v669 = vld [vmem:[%s1 + $0x158] sm:$0xf]
      %v670 = vld [vmem:[%s1 + $0x15c] sm:$0xf]
      %v671 = vld [vmem:[%s1 + $0x160] sm:$0xf]
      %v672 = vld [vmem:[%s1 + $0x164] sm:$0xf]
      %v673 = vld [vmem:[%s1 + $0x168] sm:$0xf]
      %v674 = vld [vmem:[%s1 + $0x16c] sm:$0xf]
      %v675 = vld [vmem:[%s1 + $0x170] sm:$0xf]
      %v676 = vld [vmem:[%s1 + $0x174] sm:$0xf]
      %v677 = vld [vmem:[%s1 + $0x178] sm:$0xf]
      %v678 = vld [vmem:[%s1 + $0x17c] sm:$0xf]
      %v679 = vld [vmem:[%s2 + $0x2] sm:$0x1]
      %v680 = vlaneseq
      %v681 = vshrl.u32 %v680, 7
      %v682 = vsub.s32 0, %v681
      %v683 = vrot.slane %v679, %v682
      %v716 = vunpack.c.l.b16 %v647
      %v717 = vunpack.c.l.b16 %v648
      %v718 = vunpack.c.l.b16 %v649
      %v719 = vunpack.c.l.b16 %v650
      %v720 = vunpack.c.l.b16 %v651
      %v721 = vunpack.c.l.b16 %v652
      %v722 = vunpack.c.l.b16 %v653
      %v723 = vunpack.c.l.b16 %v654
      %v724 = vunpack.c.l.b16 %v655
      %v725 = vunpack.c.l.b16 %v656
      %v726 = vunpack.c.l.b16 %v657
      %v727 = vunpack.c.l.b16 %v658
      %v728 = vunpack.c.l.b16 %v659
      %v729 = vunpack.c.l.b16 %v660
      %v730 = vunpack.c.l.b16 %v661
      %v731 = vunpack.c.l.b16 %v662
      %v732 = vunpack.c.l.b16 %v663
      %v733 = vunpack.c.l.b16 %v664
      %v734 = vunpack.c.l.b16 %v665
      %v735 = vunpack.c.l.b16 %v666
      %v736 = vunpack.c.l.b16 %v667
      %v737 = vunpack.c.l.b16 %v668
      %v738 = vunpack.c.l.b16 %v669
      %v739 = vunpack.c.l.b16 %v670
      %v740 = vunpack.c.l.b16 %v671
      %v741 = vunpack.c.l.b16 %v672
      %v742 = vunpack.c.l.b16 %v673
      %v743 = vunpack.c.l.b16 %v674
      %v744 = vunpack.c.l.b16 %v675
      %v745 = vunpack.c.l.b16 %v676
      %v746 = vunpack.c.l.b16 %v677
      %v747 = vunpack.c.l.b16 %v678
      %v748 = vpack.c.b16 %v717, %v716
      %v749 = vpack.c.b16 %v719, %v718
      %v750 = vpack.c.b16 %v721, %v720
      %v751 = vpack.c.b16 %v723, %v722
      %v752 = vpack.c.b16 %v725, %v724
      %v753 = vpack.c.b16 %v727, %v726
      %v754 = vpack.c.b16 %v729, %v728
      %v755 = vpack.c.b16 %v731, %v730
      %v756 = vpack.c.b16 %v733, %v732
      %v757 = vpack.c.b16 %v735, %v734
      %v758 = vpack.c.b16 %v737, %v736
      %v759 = vpack.c.b16 %v739, %v738
      %v760 = vpack.c.b16 %v741, %v740
      %v761 = vpack.c.b16 %v743, %v742
      %v762 = vpack.c.b16 %v745, %v744
      %v763 = vpack.c.b16 %v747, %v746
      %780 = vmatprep.subr.bf16.mxu0 0
      %781 = vmatpush1.bf16.msra.mxu0 %v748
      %782 = vmatprep.subr.bf16.mxu0 0
      %783 = vmatpush1.bf16.msra.mxu0 %v749
      %784 = vmatprep.subr.bf16.mxu0 0
      %785 = vmatpush1.bf16.msra.mxu0 %v750
      %786 = vmatprep.subr.bf16.mxu0 0
      %787 = vmatpush1.bf16.msra.mxu0 %v751
      %788 = vmatprep.subr.bf16.mxu0 0
      %789 = vmatpush1.bf16.msra.mxu0 %v752
      %790 = vmatprep.subr.bf16.mxu0 0
      %791 = vmatpush1.bf16.msra.mxu0 %v753
      %792 = vmatprep.subr.bf16.mxu0 0
      %793 = vmatpush1.bf16.msra.mxu0 %v754
      %794 = vmatprep.subr.bf16.mxu0 0
      %795 = vmatpush1.bf16.msra.mxu0 %v755
      %796 = vmatprep.subr.bf16.mxu0 0
      %797 = vmatpush1.bf16.msra.mxu0 %v756
      %798 = vmatprep.subr.bf16.mxu0 0
      %799 = vmatpush1.bf16.msra.mxu0 %v757
      %800 = vmatprep.subr.bf16.mxu0 0
      %801 = vmatpush1.bf16.msra.mxu0 %v758
      %802 = vmatprep.subr.bf16.mxu0 0
      %803 = vmatpush1.bf16.msra.mxu0 %v759
      %804 = vmatprep.subr.bf16.mxu0 0
      %805 = vmatpush1.bf16.msra.mxu0 %v760
      %806 = vmatprep.subr.bf16.mxu0 0
      %807 = vmatpush1.bf16.msra.mxu0 %v761
      %808 = vmatprep.subr.bf16.mxu0 0
      %809 = vmatpush1.bf16.msra.mxu0 %v762
      %810 = vmatprep.subr.bf16.mxu0 0
      %811 = vmatpush1.bf16.msra.mxu0 %v763
      %812 = vmatprep.mubr.bf16.mxu0 %v644
      %813 = vmatmul.mubr.bf16.gmra.mrb[0].mxu0 %v643
      %v814 = vpop.f32.mrb[0].mxu0
      %v815 = vadd.f32 %v683, %v814
      %v816 = vpop.f32.mrb[0].mxu0
      %v817 = vpop.f32.mrb[0].mxu0
      %v818 = vadd.f32 %v683, %v817
      %v819 = vpop.f32.mrb[0].mxu0
      %820 = vmatprep.mubr.bf16.mxu0 %v646
      %821 = vmatmul.mubr.bf16.gmra.mrb[0].mxu0 %v645
      %v822 = vpop.f32.mrb[0].mxu0
      %v823 = vadd.f32 %v683, %v822
      %v824 = vpop.f32.mrb[0].mxu0
      %v825 = vpop.f32.mrb[0].mxu0
      %v826 = vadd.f32 %v683, %v825
      %v827 = vpop.f32.mrb[0].mxu0
      %828 = vdwg.mxu0
      %v829 = vmul.f32 %v815, 0.5
      %v830 = vmul.f32 %v818, 0.5
      %v831 = vmul.f32 %v823, 0.5
      %v832 = vmul.f32 %v826, 0.5
      %v833 = vmul.f32 %v815, 0.70710677
      %v834 = vmul.f32 %v818, 0.70710677
      %v835 = vmul.f32 %v823, 0.70710677
      %v836 = vmul.f32 %v826, 0.70710677
      %v837 = verf.f32.pop %v833
      %v838 = verf.f32.pop %v834
      %v839 = verf.f32.pop %v835
      %v840 = verf.f32.pop %v836
      %v841 = vadd.f32 %v837, 1.0
      %v842 = vadd.f32 %v838, 1.0
      %v843 = vadd.f32 %v839, 1.0
      %v844 = vadd.f32 %v840, 1.0
      %v845 = vmul.f32 %v829, %v841
      %v846 = vmul.f32 %v830, %v842
      %v847 = vmul.f32 %v831, %v843
      %v848 = vmul.f32 %v832, %v844
      %v849 = vpack.c.bf16 %v846, %v845
      %v850 = vpack.c.bf16 %v847, %v846
      %v851 = vpack.c.bf16 %v848, %v847
      %v852 = vpack.c.bf16 0.0, %v848
      %v853 = vld [vmem:[%s1 + $0x180] sm:$0xf]
      %v854 = vld [vmem:[%s1 + $0x184] sm:$0xf]
      %v855 = vld [vmem:[%s1 + $0x188] sm:$0xf]
      %v856 = vld [vmem:[%s1 + $0x18c] sm:$0xf]
      %v857 = vld [vmem:[%s1 + $0x190] sm:$0xf]
      %v858 = vld [vmem:[%s1 + $0x194] sm:$0xf]
      %v859 = vld [vmem:[%s1 + $0x198] sm:$0xf]
      %v860 = vld [vmem:[%s1 + $0x19c] sm:$0xf]
      %v861 = vld [vmem:[%s1 + $0x1a0] sm:$0xf]
      %v862 = vld [vmem:[%s1 + $0x1a4] sm:$0xf]
      %v863 = vld [vmem:[%s1 + $0x1a8] sm:$0xf]
      %v864 = vld [vmem:[%s1 + $0x1ac] sm:$0xf]
      %v865 = vld [vmem:[%s1 + $0x1b0] sm:$0xf]
      %v866 = vld [vmem:[%s1 + $0x1b4] sm:$0xf]
      %v867 = vld [vmem:[%s1 + $0x1b8] sm:$0xf]
      %v868 = vld [vmem:[%s1 + $0x1bc] sm:$0xf]
      %v869 = vld [vmem:[%s1 + $0x1c0] sm:$0xf]
      %v870 = vld [vmem:[%s1 + $0x1c4] sm:$0xf]
      %v871 = vld [vmem:[%s1 + $0x1c8] sm:$0xf]
      %v872 = vld [vmem:[%s1 + $0x1cc] sm:$0xf]
      %v873 = vld [vmem:[%s1 + $0x1d0] sm:$0xf]
      %v874 = vld [vmem:[%s1 + $0x1d4] sm:$0xf]
      %v875 = vld [vmem:[%s1 + $0x1d8] sm:$0xf]
      %v876 = vld [vmem:[%s1 + $0x1dc] sm:$0xf]
      %v877 = vld [vmem:[%s1 + $0x1e0] sm:$0xf]
      %v878 = vld [vmem:[%s1 + $0x1e4] sm:$0xf]
      %v879 = vld [vmem:[%s1 + $0x1e8] sm:$0xf]
      %v880 = vld [vmem:[%s1 + $0x1ec] sm:$0xf]
      %v881 = vld [vmem:[%s1 + $0x1f0] sm:$0xf]
      %v882 = vld [vmem:[%s1 + $0x1f4] sm:$0xf]
      %v883 = vld [vmem:[%s1 + $0x1f8] sm:$0xf]
      %v884 = vld [vmem:[%s1 + $0x1fc] sm:$0xf]
      %v885 = vld [vmem:[%s2 + $0x3] sm:$0x1]
      %v886 = vlaneseq
      %v887 = vshrl.u32 %v886, 7
      %v888 = vsub.s32 0, %v887
      %v889 = vrot.slane %v885, %v888
      %v922 = vunpack.c.l.b16 %v853
      %v923 = vunpack.c.l.b16 %v854
      %v924 = vunpack.c.l.b16 %v855
      %v925 = vunpack.c.l.b16 %v856
      %v926 = vunpack.c.l.b16 %v857
      %v927 = vunpack.c.l.b16 %v858
      %v928 = vunpack.c.l.b16 %v859
      %v929 = vunpack.c.l.b16 %v860
      %v930 = vunpack.c.l.b16 %v861
      %v931 = vunpack.c.l.b16 %v862
      %v932 = vunpack.c.l.b16 %v863
      %v933 = vunpack.c.l.b16 %v864
      %v934 = vunpack.c.l.b16 %v865
      %v935 = vunpack.c.l.b16 %v866
      %v936 = vunpack.c.l.b16 %v867
      %v937 = vunpack.c.l.b16 %v868
      %v938 = vunpack.c.l.b16 %v869
      %v939 = vunpack.c.l.b16 %v870
      %v940 = vunpack.c.l.b16 %v871
      %v941 = vunpack.c.l.b16 %v872
      %v942 = vunpack.c.l.b16 %v873
      %v943 = vunpack.c.l.b16 %v874
      %v944 = vunpack.c.l.b16 %v875
      %v945 = vunpack.c.l.b16 %v876
      %v946 = vunpack.c.l.b16 %v877
      %v947 = vunpack.c.l.b16 %v878
      %v948 = vunpack.c.l.b16 %v879
      %v949 = vunpack.c.l.b16 %v880
      %v950 = vunpack.c.l.b16 %v881
      %v951 = vunpack.c.l.b16 %v882
      %v952 = vunpack.c.l.b16 %v883
      %v953 = vunpack.c.l.b16 %v884
      %v954 = vpack.c.b16 %v923, %v922
      %v955 = vpack.c.b16 %v925, %v924
      %v956 = vpack.c.b16 %v927, %v926
      %v957 = vpack.c.b16 %v929, %v928
      %v958 = vpack.c.b16 %v931, %v930
      %v959 = vpack.c.b16 %v933, %v932
      %v960 = vpack.c.b16 %v935, %v934
      %v961 = vpack.c.b16 %v937, %v936
      %v962 = vpack.c.b16 %v939, %v938
      %v963 = vpack.c.b16 %v941, %v940
      %v964 = vpack.c.b16 %v943, %v942
      %v965 = vpack.c.b16 %v945, %v944
      %v966 = vpack.c.b16 %v947, %v946
      %v967 = vpack.c.b16 %v949, %v948
      %v968 = vpack.c.b16 %v951, %v950
      %v969 = vpack.c.b16 %v953, %v952
      %986 = vmatprep.subr.bf16.mxu0 0
      %987 = vmatpush1.bf16.msra.mxu0 %v954
      %988 = vmatprep.subr.bf16.mxu0 0
      %989 = vmatpush1.bf16.msra.mxu0 %v955
      %990 = vmatprep.subr.bf16.mxu0 0
      %991 = vmatpush1.bf16.msra.mxu0 %v956
      %992 = vmatprep.subr.bf16.mxu0 0
      %993 = vmatpush1.bf16.msra.mxu0 %v957
      %994 = vmatprep.subr.bf16.mxu0 0
      %995 = vmatpush1.bf16.msra.mxu0 %v958
      %996 = vmatprep.subr.bf16.mxu0 0
      %997 = vmatpush1.bf16.msra.mxu0 %v959
      %998 = vmatprep.subr.bf16.mxu0 0
      %999 = vmatpush1.bf16.msra.mxu0 %v960
      %1000 = vmatprep.subr.bf16.mxu0 0
      %1001 = vmatpush1.bf16.msra.mxu0 %v961
      %1002 = vmatprep.subr.bf16.mxu0 0
      %1003 = vmatpush1.bf16.msra.mxu0 %v962
      %1004 = vmatprep.subr.bf16.mxu0 0
      %1005 = vmatpush1.bf16.msra.mxu0 %v963
      %1006 = vmatprep.subr.bf16.mxu0 0
      %1007 = vmatpush1.bf16.msra.mxu0 %v964
      %1008 = vmatprep.subr.bf16.mxu0 0
      %1009 = vmatpush1.bf16.msra.mxu0 %v965
      %1010 = vmatprep.subr.bf16.mxu0 0
      %1011 = vmatpush1.bf16.msra.mxu0 %v966
      %1012 = vmatprep.subr.bf16.mxu0 0
      %1013 = vmatpush1.bf16.msra.mxu0 %v967
      %1014 = vmatprep.subr.bf16.mxu0 0
      %1015 = vmatpush1.bf16.msra.mxu0 %v968
      %1016 = vmatprep.subr.bf16.mxu0 0
      %1017 = vmatpush1.bf16.msra.mxu0 %v969
      %1018 = vmatprep.mubr.bf16.mxu0 %v850
      %1019 = vmatmul.mubr.bf16.gmra.mrb[0].mxu0 %v849
      %v1020 = vpop.f32.mrb[0].mxu0
      %v1021 = vadd.f32 %v889, %v1020
      %v1022 = vpop.f32.mrb[0].mxu0
      %v1023 = vpop.f32.mrb[0].mxu0
      %v1024 = vadd.f32 %v889, %v1023
      %v1025 = vpop.f32.mrb[0].mxu0
      %1026 = vmatprep.mubr.bf16.mxu0 %v852
      %1027 = vmatmul.mubr.bf16.gmra.mrb[0].mxu0 %v851
      %v1028 = vpop.f32.mrb[0].mxu0
      %v1029 = vadd.f32 %v889, %v1028
      %v1030 = vpop.f32.mrb[0].mxu0
      %v1031 = vpop.f32.mrb[0].mxu0
      %v1032 = vadd.f32 %v889, %v1031
      %v1033 = vpop.f32.mrb[0].mxu0
      %1034 = vdwg.mxu0
      %v1035 = vmul.f32 %v1021, 0.5
      %v1036 = vmul.f32 %v1024, 0.5
      %v1037 = vmul.f32 %v1029, 0.5
      %v1038 = vmul.f32 %v1032, 0.5
      %v1039 = vmul.f32 %v1021, 0.70710677
      %v1040 = vmul.f32 %v1024, 0.70710677
      %v1041 = vmul.f32 %v1029, 0.70710677
      %v1042 = vmul.f32 %v1032, 0.70710677
      %v1043 = verf.f32.pop %v1039
      %v1044 = verf.f32.pop %v1040
      %v1045 = verf.f32.pop %v1041
      %v1046 = verf.f32.pop %v1042
      %v1047 = vadd.f32 %v1043, 1.0
      %v1048 = vadd.f32 %v1044, 1.0
      %v1049 = vadd.f32 %v1045, 1.0
      %v1050 = vadd.f32 %v1046, 1.0
      %v1051 = vmul.f32 %v1035, %v1047
      %v1052 = vmul.f32 %v1036, %v1048
      %v1053 = vmul.f32 %v1037, %v1049
      %v1054 = vmul.f32 %v1038, %v1050
      %v1055 = vpack.c.bf16 %v1052, %v1051
      %v1056 = vpack.c.bf16 %v1054, %v1053
      %v1057 = vld [vmem:[%s1 + $0x200] sm:$0xf]
      %v1058 = vld [vmem:[%s1 + $0x204] sm:$0xf]
      %v1059 = vld [vmem:[%s1 + $0x208] sm:$0xf]
      %v1060 = vld [vmem:[%s1 + $0x20c] sm:$0xf]
      %v1061 = vld [vmem:[%s1 + $0x210] sm:$0xf]
      %v1062 = vld [vmem:[%s1 + $0x214] sm:$0xf]
      %v1063 = vld [vmem:[%s1 + $0x218] sm:$0xf]
      %v1064 = vld [vmem:[%s1 + $0x21c] sm:$0xf]
      %v1065 = vld [vmem:[%s1 + $0x220] sm:$0xf]
      %v1066 = vld [vmem:[%s1 + $0x224] sm:$0xf]
      %v1067 = vld [vmem:[%s1 + $0x228] sm:$0xf]
      %v1068 = vld [vmem:[%s1 + $0x22c] sm:$0xf]
      %v1069 = vld [vmem:[%s1 + $0x230] sm:$0xf]
      %v1070 = vld [vmem:[%s1 + $0x234] sm:$0xf]
      %v1071 = vld [vmem:[%s1 + $0x238] sm:$0xf]
      %v1072 = vld [vmem:[%s1 + $0x23c] sm:$0xf]
      %v1073 = vld [vmem:[%s2 + $0x4] sm:$0x1]
      %v1074 = vlaneseq
      %v1075 = vshrl.u32 %v1074, 7
      %v1076 = vsub.s32 0, %v1075
      %v1077 = vrot.slane %v1073, %v1076
      %v1094 = vunpack.c.l.b16 %v1057
      %v1095 = vunpack.c.l.b16 %v1058
      %v1096 = vunpack.c.l.b16 %v1059
      %v1097 = vunpack.c.l.b16 %v1060
      %v1098 = vunpack.c.l.b16 %v1061
      %v1099 = vunpack.c.l.b16 %v1062
      %v1100 = vunpack.c.l.b16 %v1063
      %v1101 = vunpack.c.l.b16 %v1064
      %v1102 = vunpack.c.l.b16 %v1065
      %v1103 = vunpack.c.l.b16 %v1066
      %v1104 = vunpack.c.l.b16 %v1067
      %v1105 = vunpack.c.l.b16 %v1068
      %v1106 = vunpack.c.l.b16 %v1069
      %v1107 = vunpack.c.l.b16 %v1070
      %v1108 = vunpack.c.l.b16 %v1071
      %v1109 = vunpack.c.l.b16 %v1072
      %v1110 = vpack.c.b16 %v1095, %v1094
      %v1111 = vpack.c.b16 %v1097, %v1096
      %v1112 = vpack.c.b16 %v1099, %v1098
      %v1113 = vpack.c.b16 %v1101, %v1100
      %v1114 = vpack.c.b16 %v1103, %v1102
      %v1115 = vpack.c.b16 %v1105, %v1104
      %v1116 = vpack.c.b16 %v1107, %v1106
      %v1117 = vpack.c.b16 %v1109, %v1108
      %1126 = vmatprep.subr.bf16.mxu0 0
      %1127 = vmatpush1.bf16.msra.mxu0 %v1110
      %1128 = vmatprep.subr.bf16.mxu0 0
      %1129 = vmatpush1.bf16.msra.mxu0 %v1111
      %1130 = vmatprep.subr.bf16.mxu0 0
      %1131 = vmatpush1.bf16.msra.mxu0 %v1112
      %1132 = vmatprep.subr.bf16.mxu0 0
      %1133 = vmatpush1.bf16.msra.mxu0 %v1113
      %1134 = vmatprep.subr.bf16.mxu0 0
      %1135 = vmatpush1.bf16.msra.mxu0 %v1114
      %1136 = vmatprep.subr.bf16.mxu0 0
      %1137 = vmatpush1.bf16.msra.mxu0 %v1115
      %1138 = vmatprep.subr.bf16.mxu0 0
      %1139 = vmatpush1.bf16.msra.mxu0 %v1116
      %1140 = vmatprep.subr.bf16.mxu0 0
      %1141 = vmatpush1.bf16.msra.mxu0 %v1117
      %1142 = vmatprep.subr.bf16.mxu0 0
      %1143 = vmatpush1.bf16.msra.mxu0 0
      %1144 = vmatprep.subr.bf16.mxu0 0
      %1145 = vmatpush1.bf16.msra.mxu0 0
      %1146 = vmatprep.subr.bf16.mxu0 0
      %1147 = vmatpush1.bf16.msra.mxu0 0
      %1148 = vmatprep.subr.bf16.mxu0 0
      %1149 = vmatpush1.bf16.msra.mxu0 0
      %1150 = vmatprep.subr.bf16.mxu0 0
      %1151 = vmatpush1.bf16.msra.mxu0 0
      %1152 = vmatprep.subr.bf16.mxu0 0
      %1153 = vmatpush1.bf16.msra.mxu0 0
      %1154 = vmatprep.subr.bf16.mxu0 0
      %1155 = vmatpush1.bf16.msra.mxu0 0
      %1156 = vmatprep.subr.bf16.mxu0 0
      %1157 = vmatpush1.bf16.msra.mxu0 0
      %1158 = vmatprep.mubr.bf16.mxu0 0
      %1159 = vmatmul.mubr.bf16.gmra.mrb[0].mxu0 %v1055
      %v1160 = vpop.f32.mrb[0].mxu0
      %v1161 = vadd.f32 %v1077, %v1160
      %v1162 = vpop.f32.mrb[0].mxu0
      %v1163 = vpop.f32.mrb[0].mxu0
      %v1164 = vadd.f32 %v1077, %v1163
      %v1165 = vpop.f32.mrb[0].mxu0
      %1166 = vmatprep.mubr.bf16.mxu0 0
      %1167 = vmatmul.mubr.bf16.gmra.mrb[0].mxu0 %v1056
      %v1168 = vpop.f32.mrb[0].mxu0
      %v1169 = vpop.f32.mrb[0].mxu0
      %v1170 = vpop.f32.mrb[0].mxu0
      %v1171 = vpop.f32.mrb[0].mxu0
      %1172 = vdwg.mxu0
      %1173 = vst [vmem:[%s170] sm:$0xff] %v1161
      %1174 = vst [vmem:[%s170 + $0x8] sm:$0xff] %v1164
      %p1175 = scmp.lt.s32.totalorder %s14, 1
      %s1176 = scalar_select %p1175, %s14, 1
      %s1177 = smul.addr %s1176, 2
      %s1178 = smul.addr %s1177, 8
      %s1179 = scalar_lea.vmem %s3, %s1178
      // Predicated region
      $region33: #{cnnb_forward.1} parent=31 // pred_check
        %p1180 = pneg %p100
      $region34: #{cnnb_forward.1} parent=31 // pred_check_branch
        %1182 = sbr.rel (%p1180) target = $region36
      $region35: #{cnnb_forward.1} parent=31 // pred_region
        _
      $region36: #{cnnb_forward.1} parent=31 // pred_fallthru
        _
    $region32: #{cnnb_forward.1} parent=5 // pred_fallthru
      _
    %p1183 = scmp.le.s32.totalorder 2, %s9
    // Predicated region
    $region37: #{cnnb_forward.1} parent=5 // pred_check
      %p1184 = pneg %p1183
    $region38: #{cnnb_forward.1} parent=5 // pred_check_branch
      %1186 = sbr.rel (%p1184) target = $region40
    $region39: #{cnnb_forward.1} parent=5 // pred_region
      %s1187 = ssub.s32 %s9, 2
      // Predicated region
      $region41: #{cnnb_forward.1} parent=39 // pred_check
        %p1188 = pneg %p106
      $region42: #{cnnb_forward.1} parent=39 // pred_check_branch
        %1190 = sbr.rel (%p1188) target = $region44
      $region43: #{cnnb_forward.1} parent=39 // pred_region
        %p1191 = scmp.lt.s32.totalorder %s15, 1
        %s1192 = scalar_select %p1191, %s15, 1
        %s1193 = smul.addr %s1192, 2
        %s1194 = smul.addr %s1193, 8
        %s1195 = scalar_lea.vmem %s3, %s1194
      $region44: #{cnnb_forward.1} parent=39 // pred_fallthru
        _
    $region40: #{cnnb_forward.1} parent=5 // pred_fallthru
      _
  $region6: #{cnnb_forward.1} parent=0 // loop_footer
    %s13 = sadd.s32 1, %s9
  $region7: #{cnnb_forward.1} parent=0 // loop_footer_branch
    %8 = sbr.rel target = $region3
  $region8: #{cnnb_forward.1} parent=0 // loop_exit
    _

</llo_original>
